<compile_context>
chip_gen: v6e
topology: v6e:2x2x1
jax: 0.10.0
libtpu: 0.0.40
codegen_flags: <defaults>
</compile_context>

<pallas_src>
import functools

import jax
import jax.numpy as jnp
from jax.experimental import pallas as pl
from jax.experimental.pallas import tpu as pltpu


def cnn_kernel(x_ref, slab_ref, wfc_ref, out_ref):
    # x_ref:    (B, H, W) f32            H on sublanes, W on lanes
    # slab_ref: (4, C2+2, C1, 128) f32   packed conv weights + all biases
    #             [t, 0,    :, 0]  = conv1 weight tap t (over C1)
    #             [t, 1+d,  :, 0]  = conv2 weight tap t, out-channel d (over C1)
    #             [1, C2+1, :, 0]  = conv1 bias
    #             [2, C2+1, :C2,0] = conv2 bias
    #             [0, C2+1, 0, :]  = fc bias, padded to 128 lanes
    # wfc_ref:  (C2, W2, 128) bf16       fc weight, lane-dense padded output
    # out_ref:  (B, 128) f32
    B, H, W = x_ref.shape
    _, c2p2, C1, NP = slab_ref.shape
    C2 = c2p2 - 2
    H1, W1 = H - 1, W - 1          # conv1 output spatial
    W2 = W1 - 1                    # conv2 output width (height collapses to 1)

    x = x_ref[...]                                    # (B, H, W)
    x_sh = x[:, :, 1:W]                               # (B, H, W1): only lane-crossing slice of x

    # ---- conv1 (1 -> C1, k=2) + ReLU, tap index t = di*2 + dj ----------------
    taps1 = (
        (x[:, 0:H1, 0:W1], 0),     # (di=0, dj=0)
        (x_sh[:, 0:H1, :], 1),     # (0, 1)
        (x[:, 1:H, 0:W1], 2),      # (1, 0)
        (x_sh[:, 1:H, :], 3),      # (1, 1)
    )
    acc1 = None
    for xt, t in taps1:
        w1_t = slab_ref[t, 0, :, 0:1]                               # (C1, 1)
        term = xt[:, :, None, :] * w1_t[None, None, :, :]           # (B, H1, C1, W1)
        acc1 = term if acc1 is None else acc1 + term
    b1 = slab_ref[1, C2 + 1, :, 0:1]                                # (C1, 1)
    h1 = jnp.maximum(acc1 + b1[None, None, :, :], 0.0)              # (B, H1, C1, W1)

    # ---- conv2 (C1 -> C2, k=2) + ReLU ----------------------------------------
    h1_sh = h1[:, :, :, 1:W1]                         # (B, H1, C1, W2): only lane-crossing slice of h1
    taps2 = (
        (h1[:, 0, :, 0:W2], 0),    # (di=0, dj=0)
        (h1_sh[:, 0], 1),          # (0, 1)
        (h1[:, 1, :, 0:W2], 2),    # (1, 0)
        (h1_sh[:, 1], 3),          # (1, 1)
    )
    acc2 = None
    for st, t in taps2:
        w2_t = slab_ref[t, 1:1 + C2, :, 0:1]                        # (C2, C1, 1)
        term = st[None, :, :, :] * w2_t[:, None, :, :]              # (C2, B, C1, W2)
        acc2 = term if acc2 is None else acc2 + term
    b2 = slab_ref[2, C2 + 1, 0:C2, 0:1]                             # (C2, 1)
    h2 = jnp.maximum(jnp.sum(acc2, axis=2) + b2[:, None, :], 0.0)   # (C2, B, W2)

    # ---- fc1 + Sigmoid: C2 independent MXU dots, tree-added -----------------
    h2_bf = h2.astype(wfc_ref.dtype)                  # bf16 inputs, f32 MXU accumulation
    parts = [jnp.dot(h2_bf[d], wfc_ref[d], preferred_element_type=jnp.float32)
             for d in range(C2)]                      # each (B, NP)
    while len(parts) > 1:                             # tree add -> back-to-back MXU pushes
        nxt = [parts[i] + parts[i + 1] for i in range(0, len(parts) - 1, 2)]
        if len(parts) % 2:
            nxt.append(parts[-1])
        parts = nxt
    out = parts[0] + slab_ref[0, C2 + 1, 0:1, :]      # + fc bias (1, NP), broadcast over B
    out_ref[...] = 0.5 * jnp.tanh(0.5 * out) + 0.5    # sigmoid as a single EUP transcendental


def prepare_params(params):
    """One-time parameter relayout.  Cache the result and reuse across forward calls."""
    w1, b1, w2, b2, wfc, bfc = params
    C1 = w1.shape[0]
    C2 = w2.shape[0]
    O = wfc.shape[0]
    W2 = wfc.shape[1] // C2
    NP = 128 * ((O + 127) // 128)
    assert NP == 128, "kernel assumes output_number <= 128 (single lane-dense output tile)"
    assert C2 <= C1, "conv2 bias packing assumes C2 <= C1"
    f32 = jnp.float32

    # Packed f32 slab: conv weights at lane 0 (channels on sublanes), biases tucked
    # into the spare (C2+1) row of taps 0/1/2, fc bias lane-dense in tap 0.
    w1_t = w1.astype(f32).reshape(C1, 4).T                                # (4, C1), t = di*2+dj
    w2_t = w2.astype(f32).reshape(C2, C1, 4).transpose(2, 0, 1)           # (4, C2, C1)
    slab = jnp.zeros((4, C2 + 2, C1, NP), f32)
    slab = slab.at[:, 0, :, 0].set(w1_t)
    slab = slab.at[:, 1:1 + C2, :, 0].set(w2_t)
    slab = slab.at[1, C2 + 1, :, 0].set(b1.astype(f32))
    slab = slab.at[2, C2 + 1, 0:C2, 0].set(b2.astype(f32))
    slab = slab.at[0, C2 + 1, 0, :].set(jnp.pad(bfc.astype(f32), (0, NP - O)))

    # FC weight: (O, C2*W2) -> (C2, W2, NP) bf16, lane-dense padded output axis.
    wfc_r = wfc.astype(f32).reshape(O, C2, W2).transpose(1, 2, 0)         # (C2, W2, O)
    wfc_r = jnp.pad(wfc_r, ((0, 0), (0, 0), (0, NP - O))).astype(jnp.bfloat16)

    return jax.device_put(slab), jax.device_put(wfc_r), int(O)


@functools.partial(jax.jit, static_argnames=("out_dim",))
def _cnn_forward_jit(x, slab, wfc_r, *, out_dim):
    B, H, W = x.shape
    C2, W2, NP = wfc_r.shape
    # Hard-coded lane geometry of the kernel (module requires (H-2)*(W-2) == 126).
    assert H - 2 == 1, f"kernel assumes the conv stack collapses height to 1 (H == 3), got H={H}"
    assert W - 2 == W2, f"kernel assumes W - 2 == {W2}, got W={W}"
    vmem = lambda: pl.BlockSpec(memory_space=pltpu.MemorySpace.VMEM)
    out = pl.pallas_call(
        cnn_kernel,
        out_shape=jax.ShapeDtypeStruct((B, NP), jnp.float32),
        in_specs=[vmem()] * 3,
        out_specs=vmem(),
    )(x.astype(jnp.float32), slab, wfc_r)
    return out[:, :out_dim]


def cnn_forward(x, prepared):
    """x: (B, H, W) float32; prepared = prepare_params(params) (computed once)."""
    slab, wfc_r, out_dim = prepared
    return _cnn_forward_jit(x, slab, wfc_r, out_dim=out_dim)


def cnn_reference(x, params):
    """Pure-JAX reference matching the PyTorch forward exactly."""
    w1, b1, w2, b2, wfc, bfc = params
    xi = x[:, None, :, :]                                          # unsqueeze(1) -> NCHW
    dn = ('NCHW', 'OIHW', 'NCHW')
    h1 = jax.lax.conv_general_dilated(xi, w1, (1, 1), 'VALID', dimension_numbers=dn)
    h1 = jnp.maximum(h1 + b1[None, :, None, None], 0.0)
    h2 = jax.lax.conv_general_dilated(h1, w2, (1, 1), 'VALID', dimension_numbers=dn)
    h2 = jnp.maximum(h2 + b2[None, :, None, None], 0.0)
    flat = h2.reshape(h2.shape[0], -1)
    return jax.nn.sigmoid(flat @ wfc.T + bfc)


if __name__ == "__main__":
    # Module config: hidden_channel_num=8, output_number=10.
    # fc1 expects (hidden/2)*126 features => (H-2)*(W-2) must equal 126; use H=3, W=128.
    C1, O = 8, 10
    C2 = C1 // 2
    B, H, W = 2, 3, 128

    key = jax.random.PRNGKey(0)
    k = jax.random.split(key, 7)
    w1 = jax.random.normal(k[0], (C1, 1, 2, 2), jnp.float32) * 0.5
    b1 = jax.random.normal(k[1], (C1,), jnp.float32) * 0.1
    w2 = jax.random.normal(k[2], (C2, C1, 2, 2), jnp.float32) * 0.2
    b2 = jax.random.normal(k[3], (C2,), jnp.float32) * 0.1
    wfc = jax.random.normal(k[4], (O, C2 * 126), jnp.float32) * 0.05
    bfc = jax.random.normal(k[5], (O,), jnp.float32) * 0.1
    x = jax.random.normal(k[6], (B, H, W), jnp.float32)

    params = (w1, b1, w2, b2, wfc, bfc)

    # One-time weight relayout (cache this; the per-call path is just the kernel + slice).
    prepared = prepare_params(params)

    out = cnn_forward(x, prepared)
    out = jax.block_until_ready(out)

    ref = cnn_reference(x, params)
    assert out.shape == (B, O)
    # tolerance covers the bf16 FC weights (f32 accumulation) and EUP tanh sigmoid
    assert jnp.allclose(out, ref, atol=2e-3, rtol=2e-3), (out, ref)

    print("KERNEL_OK")
</pallas_src>

<mosaic_0001>
module attributes {stable_mosaic.version = 11 : i64} {
  func.func @cnn_kernel(%arg0: memref<2x3x128xf32, #tpu.memory_space<vmem>>, %arg1: memref<4x6x8x128xf32, #tpu.memory_space<vmem>>, %arg2: memref<4x126x128xbf16, #tpu.memory_space<vmem>>, %arg3: memref<2x128xf32, #tpu.memory_space<vmem>>) attributes {dimension_semantics = [], scalar_prefetch = 0 : i64, scratch_operands = 0 : i64, tpu.core_type = #tpu.core_type<tc>} {
    %c0 = arith.constant 0 : index
    %c0_0 = arith.constant 0 : index
    %c0_1 = arith.constant 0 : index
    %0 = vector.load %arg0[%c0, %c0_0, %c0_1] : memref<2x3x128xf32, #tpu.memory_space<vmem>>, vector<2x3x128xf32>
    %1 = vector.extract_strided_slice %0 {offsets = [0, 0, 1], sizes = [2, 3, 127], strides = [1, 1, 1]} : vector<2x3x128xf32> to vector<2x3x127xf32>
    %2 = vector.extract_strided_slice %0 {offsets = [0, 0, 0], sizes = [2, 2, 127], strides = [1, 1, 1]} : vector<2x3x128xf32> to vector<2x2x127xf32>
    %3 = vector.extract_strided_slice %1 {offsets = [0, 0, 0], sizes = [2, 2, 127], strides = [1, 1, 1]} : vector<2x3x127xf32> to vector<2x2x127xf32>
    %4 = vector.extract_strided_slice %0 {offsets = [0, 1, 0], sizes = [2, 2, 127], strides = [1, 1, 1]} : vector<2x3x128xf32> to vector<2x2x127xf32>
    %5 = vector.extract_strided_slice %1 {offsets = [0, 1, 0], sizes = [2, 2, 127], strides = [1, 1, 1]} : vector<2x3x127xf32> to vector<2x2x127xf32>
    %c0_2 = arith.constant 0 : index
    %c0_3 = arith.constant 0 : index
    %c0_4 = arith.constant 0 : index
    %c0_5 = arith.constant 0 : index
    %6 = vector.load %arg1[%c0_2, %c0_3, %c0_4, %c0_5] : memref<4x6x8x128xf32, #tpu.memory_space<vmem>>, vector<1x1x8x1xf32>
    %7 = vector.shape_cast %6 : vector<1x1x8x1xf32> to vector<8x1xf32>
    %8 = vector.shape_cast %2 : vector<2x2x127xf32> to vector<2x2x1x127xf32>
    %9 = vector.shape_cast %7 : vector<8x1xf32> to vector<1x1x8x1xf32>
    %10 = vector.broadcast %8 : vector<2x2x1x127xf32> to vector<2x2x8x127xf32>
    %11 = vector.broadcast %9 : vector<1x1x8x1xf32> to vector<2x2x8x127xf32>
    %12 = arith.mulf %10, %11 : vector<2x2x8x127xf32>
    %c1 = arith.constant 1 : index
    %c0_6 = arith.constant 0 : index
    %c0_7 = arith.constant 0 : index
    %c0_8 = arith.constant 0 : index
    %13 = vector.load %arg1[%c1, %c0_6, %c0_7, %c0_8] : memref<4x6x8x128xf32, #tpu.memory_space<vmem>>, vector<1x1x8x1xf32>
    %14 = vector.shape_cast %13 : vector<1x1x8x1xf32> to vector<8x1xf32>
    %15 = vector.shape_cast %3 : vector<2x2x127xf32> to vector<2x2x1x127xf32>
    %16 = vector.shape_cast %14 : vector<8x1xf32> to vector<1x1x8x1xf32>
    %17 = vector.broadcast %15 : vector<2x2x1x127xf32> to vector<2x2x8x127xf32>
    %18 = vector.broadcast %16 : vector<1x1x8x1xf32> to vector<2x2x8x127xf32>
    %19 = arith.mulf %17, %18 : vector<2x2x8x127xf32>
    %20 = arith.addf %12, %19 : vector<2x2x8x127xf32>
    %c2 = arith.constant 2 : index
    %c0_9 = arith.constant 0 : index
    %c0_10 = arith.constant 0 : index
    %c0_11 = arith.constant 0 : index
    %21 = vector.load %arg1[%c2, %c0_9, %c0_10, %c0_11] : memref<4x6x8x128xf32, #tpu.memory_space<vmem>>, vector<1x1x8x1xf32>
    %22 = vector.shape_cast %21 : vector<1x1x8x1xf32> to vector<8x1xf32>
    %23 = vector.shape_cast %4 : vector<2x2x127xf32> to vector<2x2x1x127xf32>
    %24 = vector.shape_cast %22 : vector<8x1xf32> to vector<1x1x8x1xf32>
    %25 = vector.broadcast %23 : vector<2x2x1x127xf32> to vector<2x2x8x127xf32>
    %26 = vector.broadcast %24 : vector<1x1x8x1xf32> to vector<2x2x8x127xf32>
    %27 = arith.mulf %25, %26 : vector<2x2x8x127xf32>
    %28 = arith.addf %20, %27 : vector<2x2x8x127xf32>
    %c3 = arith.constant 3 : index
    %c0_12 = arith.constant 0 : index
    %c0_13 = arith.constant 0 : index
    %c0_14 = arith.constant 0 : index
    %29 = vector.load %arg1[%c3, %c0_12, %c0_13, %c0_14] : memref<4x6x8x128xf32, #tpu.memory_space<vmem>>, vector<1x1x8x1xf32>
    %30 = vector.shape_cast %29 : vector<1x1x8x1xf32> to vector<8x1xf32>
    %31 = vector.shape_cast %5 : vector<2x2x127xf32> to vector<2x2x1x127xf32>
    %32 = vector.shape_cast %30 : vector<8x1xf32> to vector<1x1x8x1xf32>
    %33 = vector.broadcast %31 : vector<2x2x1x127xf32> to vector<2x2x8x127xf32>
    %34 = vector.broadcast %32 : vector<1x1x8x1xf32> to vector<2x2x8x127xf32>
    %35 = arith.mulf %33, %34 : vector<2x2x8x127xf32>
    %36 = arith.addf %28, %35 : vector<2x2x8x127xf32>
    %c1_15 = arith.constant 1 : index
    %c5 = arith.constant 5 : index
    %c0_16 = arith.constant 0 : index
    %c0_17 = arith.constant 0 : index
    %37 = vector.load %arg1[%c1_15, %c5, %c0_16, %c0_17] : memref<4x6x8x128xf32, #tpu.memory_space<vmem>>, vector<1x1x8x1xf32>
    %38 = vector.shape_cast %37 : vector<1x1x8x1xf32> to vector<8x1xf32>
    %39 = vector.shape_cast %38 : vector<8x1xf32> to vector<1x1x8x1xf32>
    %40 = vector.broadcast %39 : vector<1x1x8x1xf32> to vector<2x2x8x127xf32>
    %41 = arith.addf %36, %40 : vector<2x2x8x127xf32>
    %cst = arith.constant 0.000000e+00 : f32
    %42 = vector.broadcast %cst : f32 to vector<2x2x8x127xf32>
    %43 = arith.maximumf %41, %42 : vector<2x2x8x127xf32>
    %44 = vector.extract_strided_slice %43 {offsets = [0, 0, 0, 1], sizes = [2, 2, 8, 126], strides = [1, 1, 1, 1]} : vector<2x2x8x127xf32> to vector<2x2x8x126xf32>
    %45 = vector.extract_strided_slice %43 {offsets = [0, 0, 0, 0], sizes = [2, 1, 8, 126], strides = [1, 1, 1, 1]} : vector<2x2x8x127xf32> to vector<2x1x8x126xf32>
    %46 = vector.shape_cast %45 : vector<2x1x8x126xf32> to vector<2x8x126xf32>
    %47 = vector.extract_strided_slice %44 {offsets = [0, 0, 0, 0], sizes = [2, 1, 8, 126], strides = [1, 1, 1, 1]} : vector<2x2x8x126xf32> to vector<2x1x8x126xf32>
    %48 = vector.shape_cast %47 : vector<2x1x8x126xf32> to vector<2x8x126xf32>
    %49 = vector.extract_strided_slice %43 {offsets = [0, 1, 0, 0], sizes = [2, 1, 8, 126], strides = [1, 1, 1, 1]} : vector<2x2x8x127xf32> to vector<2x1x8x126xf32>
    %50 = vector.shape_cast %49 : vector<2x1x8x126xf32> to vector<2x8x126xf32>
    %51 = vector.extract_strided_slice %44 {offsets = [0, 1, 0, 0], sizes = [2, 1, 8, 126], strides = [1, 1, 1, 1]} : vector<2x2x8x126xf32> to vector<2x1x8x126xf32>
    %52 = vector.shape_cast %51 : vector<2x1x8x126xf32> to vector<2x8x126xf32>
    %c0_18 = arith.constant 0 : index
    %c1_19 = arith.constant 1 : index
    %c0_20 = arith.constant 0 : index
    %c0_21 = arith.constant 0 : index
    %53 = vector.load %arg1[%c0_18, %c1_19, %c0_20, %c0_21] : memref<4x6x8x128xf32, #tpu.memory_space<vmem>>, vector<1x4x8x1xf32>
    %54 = vector.shape_cast %53 : vector<1x4x8x1xf32> to vector<4x8x1xf32>
    %55 = vector.shape_cast %46 : vector<2x8x126xf32> to vector<1x2x8x126xf32>
    %56 = vector.shape_cast %54 : vector<4x8x1xf32> to vector<4x1x8x1xf32>
    %57 = vector.broadcast %55 : vector<1x2x8x126xf32> to vector<4x2x8x126xf32>
    %58 = vector.broadcast %56 : vector<4x1x8x1xf32> to vector<4x2x8x126xf32>
    %59 = arith.mulf %57, %58 : vector<4x2x8x126xf32>
    %c1_22 = arith.constant 1 : index
    %c1_23 = arith.constant 1 : index
    %c0_24 = arith.constant 0 : index
    %c0_25 = arith.constant 0 : index
    %60 = vector.load %arg1[%c1_22, %c1_23, %c0_24, %c0_25] : memref<4x6x8x128xf32, #tpu.memory_space<vmem>>, vector<1x4x8x1xf32>
    %61 = vector.shape_cast %60 : vector<1x4x8x1xf32> to vector<4x8x1xf32>
    %62 = vector.shape_cast %48 : vector<2x8x126xf32> to vector<1x2x8x126xf32>
    %63 = vector.shape_cast %61 : vector<4x8x1xf32> to vector<4x1x8x1xf32>
    %64 = vector.broadcast %62 : vector<1x2x8x126xf32> to vector<4x2x8x126xf32>
    %65 = vector.broadcast %63 : vector<4x1x8x1xf32> to vector<4x2x8x126xf32>
    %66 = arith.mulf %64, %65 : vector<4x2x8x126xf32>
    %67 = arith.addf %59, %66 : vector<4x2x8x126xf32>
    %c2_26 = arith.constant 2 : index
    %c1_27 = arith.constant 1 : index
    %c0_28 = arith.constant 0 : index
    %c0_29 = arith.constant 0 : index
    %68 = vector.load %arg1[%c2_26, %c1_27, %c0_28, %c0_29] : memref<4x6x8x128xf32, #tpu.memory_space<vmem>>, vector<1x4x8x1xf32>
    %69 = vector.shape_cast %68 : vector<1x4x8x1xf32> to vector<4x8x1xf32>
    %70 = vector.shape_cast %50 : vector<2x8x126xf32> to vector<1x2x8x126xf32>
    %71 = vector.shape_cast %69 : vector<4x8x1xf32> to vector<4x1x8x1xf32>
    %72 = vector.broadcast %70 : vector<1x2x8x126xf32> to vector<4x2x8x126xf32>
    %73 = vector.broadcast %71 : vector<4x1x8x1xf32> to vector<4x2x8x126xf32>
    %74 = arith.mulf %72, %73 : vector<4x2x8x126xf32>
    %75 = arith.addf %67, %74 : vector<4x2x8x126xf32>
    %c3_30 = arith.constant 3 : index
    %c1_31 = arith.constant 1 : index
    %c0_32 = arith.constant 0 : index
    %c0_33 = arith.constant 0 : index
    %76 = vector.load %arg1[%c3_30, %c1_31, %c0_32, %c0_33] : memref<4x6x8x128xf32, #tpu.memory_space<vmem>>, vector<1x4x8x1xf32>
    %77 = vector.shape_cast %76 : vector<1x4x8x1xf32> to vector<4x8x1xf32>
    %78 = vector.shape_cast %52 : vector<2x8x126xf32> to vector<1x2x8x126xf32>
    %79 = vector.shape_cast %77 : vector<4x8x1xf32> to vector<4x1x8x1xf32>
    %80 = vector.broadcast %78 : vector<1x2x8x126xf32> to vector<4x2x8x126xf32>
    %81 = vector.broadcast %79 : vector<4x1x8x1xf32> to vector<4x2x8x126xf32>
    %82 = arith.mulf %80, %81 : vector<4x2x8x126xf32>
    %83 = arith.addf %75, %82 : vector<4x2x8x126xf32>
    %c2_34 = arith.constant 2 : index
    %c5_35 = arith.constant 5 : index
    %c0_36 = arith.constant 0 : index
    %c0_37 = arith.constant 0 : index
    %84 = vector.load %arg1[%c2_34, %c5_35, %c0_36, %c0_37] : memref<4x6x8x128xf32, #tpu.memory_space<vmem>>, vector<1x1x4x1xf32>
    %85 = vector.shape_cast %84 : vector<1x1x4x1xf32> to vector<4x1xf32>
    %cst_38 = arith.constant dense<0.000000e+00> : vector<4x2x126xf32>
    %86 = vector.multi_reduction <add>, %83, %cst_38 [2] : vector<4x2x8x126xf32> to vector<4x2x126xf32>
    %87 = vector.shape_cast %85 : vector<4x1xf32> to vector<4x1x1xf32>
    %88 = vector.broadcast %87 : vector<4x1x1xf32> to vector<4x2x126xf32>
    %89 = arith.addf %86, %88 : vector<4x2x126xf32>
    %cst_39 = arith.constant 0.000000e+00 : f32
    %90 = vector.broadcast %cst_39 : f32 to vector<4x2x126xf32>
    %91 = arith.maximumf %89, %90 : vector<4x2x126xf32>
    %92 = arith.truncf %91 : vector<4x2x126xf32> to vector<4x2x126xbf16>
    %93 = vector.extract_strided_slice %92 {offsets = [0, 0, 0], sizes = [1, 2, 126], strides = [1, 1, 1]} : vector<4x2x126xbf16> to vector<1x2x126xbf16>
    %94 = vector.shape_cast %93 : vector<1x2x126xbf16> to vector<2x126xbf16>
    %c0_40 = arith.constant 0 : index
    %c0_41 = arith.constant 0 : index
    %c0_42 = arith.constant 0 : index
    %95 = vector.load %arg2[%c0_40, %c0_41, %c0_42] : memref<4x126x128xbf16, #tpu.memory_space<vmem>>, vector<1x126x128xbf16>
    %96 = vector.shape_cast %95 : vector<1x126x128xbf16> to vector<126x128xbf16>
    %cst_43 = arith.constant dense<0.000000e+00> : vector<2x128xf32>
    %97 = tpu.matmul %94, %96, %cst_43 {dimension_numbers = #tpu.dot_dimension_numbers<[1], [0], [0], [1], [0, 0, 1, 1], [], []>} : vector<2x126xbf16>, vector<126x128xbf16>, vector<2x128xf32> -> vector<2x128xf32>
    %98 = vector.extract_strided_slice %92 {offsets = [1, 0, 0], sizes = [1, 2, 126], strides = [1, 1, 1]} : vector<4x2x126xbf16> to vector<1x2x126xbf16>
    %99 = vector.shape_cast %98 : vector<1x2x126xbf16> to vector<2x126xbf16>
    %c1_44 = arith.constant 1 : index
    %c0_45 = arith.constant 0 : index
    %c0_46 = arith.constant 0 : index
    %100 = vector.load %arg2[%c1_44, %c0_45, %c0_46] : memref<4x126x128xbf16, #tpu.memory_space<vmem>>, vector<1x126x128xbf16>
    %101 = vector.shape_cast %100 : vector<1x126x128xbf16> to vector<126x128xbf16>
    %cst_47 = arith.constant dense<0.000000e+00> : vector<2x128xf32>
    %102 = tpu.matmul %99, %101, %cst_47 {dimension_numbers = #tpu.dot_dimension_numbers<[1], [0], [0], [1], [0, 0, 1, 1], [], []>} : vector<2x126xbf16>, vector<126x128xbf16>, vector<2x128xf32> -> vector<2x128xf32>
    %103 = vector.extract_strided_slice %92 {offsets = [2, 0, 0], sizes = [1, 2, 126], strides = [1, 1, 1]} : vector<4x2x126xbf16> to vector<1x2x126xbf16>
    %104 = vector.shape_cast %103 : vector<1x2x126xbf16> to vector<2x126xbf16>
    %c2_48 = arith.constant 2 : index
    %c0_49 = arith.constant 0 : index
    %c0_50 = arith.constant 0 : index
    %105 = vector.load %arg2[%c2_48, %c0_49, %c0_50] : memref<4x126x128xbf16, #tpu.memory_space<vmem>>, vector<1x126x128xbf16>
    %106 = vector.shape_cast %105 : vector<1x126x128xbf16> to vector<126x128xbf16>
    %cst_51 = arith.constant dense<0.000000e+00> : vector<2x128xf32>
    %107 = tpu.matmul %104, %106, %cst_51 {dimension_numbers = #tpu.dot_dimension_numbers<[1], [0], [0], [1], [0, 0, 1, 1], [], []>} : vector<2x126xbf16>, vector<126x128xbf16>, vector<2x128xf32> -> vector<2x128xf32>
    %108 = vector.extract_strided_slice %92 {offsets = [3, 0, 0], sizes = [1, 2, 126], strides = [1, 1, 1]} : vector<4x2x126xbf16> to vector<1x2x126xbf16>
    %109 = vector.shape_cast %108 : vector<1x2x126xbf16> to vector<2x126xbf16>
    %c3_52 = arith.constant 3 : index
    %c0_53 = arith.constant 0 : index
    %c0_54 = arith.constant 0 : index
    %110 = vector.load %arg2[%c3_52, %c0_53, %c0_54] : memref<4x126x128xbf16, #tpu.memory_space<vmem>>, vector<1x126x128xbf16>
    %111 = vector.shape_cast %110 : vector<1x126x128xbf16> to vector<126x128xbf16>
    %cst_55 = arith.constant dense<0.000000e+00> : vector<2x128xf32>
    %112 = tpu.matmul %109, %111, %cst_55 {dimension_numbers = #tpu.dot_dimension_numbers<[1], [0], [0], [1], [0, 0, 1, 1], [], []>} : vector<2x126xbf16>, vector<126x128xbf16>, vector<2x128xf32> -> vector<2x128xf32>
    %113 = arith.addf %97, %102 : vector<2x128xf32>
    %114 = arith.addf %107, %112 : vector<2x128xf32>
    %115 = arith.addf %113, %114 : vector<2x128xf32>
    %c0_56 = arith.constant 0 : index
    %c5_57 = arith.constant 5 : index
    %c0_58 = arith.constant 0 : index
    %c0_59 = arith.constant 0 : index
    %116 = vector.load %arg1[%c0_56, %c5_57, %c0_58, %c0_59] : memref<4x6x8x128xf32, #tpu.memory_space<vmem>>, vector<1x1x1x128xf32>
    %117 = vector.shape_cast %116 : vector<1x1x1x128xf32> to vector<1x128xf32>
    %118 = vector.broadcast %117 : vector<1x128xf32> to vector<2x128xf32>
    %119 = arith.addf %115, %118 : vector<2x128xf32>
    %cst_60 = arith.constant 5.000000e-01 : f32
    %120 = vector.broadcast %cst_60 : f32 to vector<2x128xf32>
    %121 = arith.mulf %120, %119 : vector<2x128xf32>
    %122 = math.tanh %121 : vector<2x128xf32>
    %cst_61 = arith.constant 5.000000e-01 : f32
    %123 = vector.broadcast %cst_61 : f32 to vector<2x128xf32>
    %124 = arith.mulf %123, %122 : vector<2x128xf32>
    %cst_62 = arith.constant 5.000000e-01 : f32
    %125 = vector.broadcast %cst_62 : f32 to vector<2x128xf32>
    %126 = arith.addf %124, %125 : vector<2x128xf32>
    %c0_63 = arith.constant 0 : index
    %c0_64 = arith.constant 0 : index
    %127 = vector.load %arg3[%c0_63, %c0_64] : memref<2x128xf32, #tpu.memory_space<vmem>>, vector<2x128xf32>
    tpu.vector_store %arg3[%c0_63, %c0_64], %126 {strides = array<i32>} : memref<2x128xf32, #tpu.memory_space<vmem>>, vector<2x128xf32>,
    return
  }
}

</mosaic_0001>

<llo_original>
// kernel: _cnn_forward_jit.1
$region0: #{_cnn_forward_jit.1}
  #allocation0 [shape = 'u32[]', space=smem, size = 0x4, offset = 0x4, fixed_abs, tag = 'smem constant byte address 0x4 - core index']
  #allocation1 [shape = 'u32[144,128]{1,0:T(1,128)}', space=vmem, size = 0x12000, scoped, tag = 'internal scratch']
  %s0 = inlined_call_operand.vmem [shape: f32[2,3,128], index: 0, kind: input, shape index: {}]
  %s1 = inlined_call_operand.vmem [shape: f32[4,6,8,128], index: 1, kind: input, shape index: {}]
  %s2 = inlined_call_operand.vmem [shape: bf16[4,126,128], index: 2, kind: input, shape index: {}]
  %s3 = inlined_call_operand.hbm [shape: f32[2,128], index: 3, kind: output, shape index: {}]
  %s4 = sld [smem:[#allocation0]]
  $region22: #{_cnn_forward_jit.1} parent=0
    _
  %s6 = ssub.s32 1, %s4
  %s7 = scalar_select 0, %s6, %s4
  $region1: #{_cnn_forward_jit.1} parent=0
    #allocation2 [shape = 'u8[1024]{0}', space=vmem, size = 0x400, scoped, tag = 'output window, operand 0, single buffered']
    #allocation3 [shape = 's32[1]{0}', space=sflag, size = 0x4, scoped, tag = 'scoped memory for _cnn_forward_jit.1']
    %8 = vsyncpa [#allocation3], 0
    // Predicated region
    $region2: #{_cnn_forward_jit.1} parent=1 // pred_check
      _
    $region3: #{_cnn_forward_jit.1} parent=1 // pred_check_branch
      %10 = sbr.rel (0) target = $region5
    $region4: #{_cnn_forward_jit.1} parent=1 // pred_region
      _
    $region5: #{_cnn_forward_jit.1} parent=1 // pred_fallthru
      _
    // Predicated region
    $region6: #{_cnn_forward_jit.1} parent=1 // pred_check
      _
    $region7: #{_cnn_forward_jit.1} parent=1 // pred_check_branch
      %12 = sbr.rel (0) target = $region9
    $region8: #{_cnn_forward_jit.1} parent=1 // pred_region
      _
    $region9: #{_cnn_forward_jit.1} parent=1 // pred_fallthru
      _
    // Predicated region
    $region10: #{_cnn_forward_jit.1} parent=1 // pred_check
      _
    $region11: #{_cnn_forward_jit.1} parent=1 // pred_check_branch
      %14 = sbr.rel (0) target = $region13
    $region12: #{_cnn_forward_jit.1} parent=1 // pred_region
      _
    $region13: #{_cnn_forward_jit.1} parent=1 // pred_fallthru
      _
    %v16 = vld [vmem:[%s0] sm:$0x7]
    %v17 = vld [vmem:[%s0 + $0x4] sm:$0x7]
    %v18 = vld [vmem:[%s1] sm:$0xff]
    %v22 = vunpack.c.l.s4 1966171168
    %v23 = vunpack.c.0.s8 %v22
    %v24 = vlaneseq
    %v25 = vshrl.u32 %v24, 7
    %v26 = vsub.s32 %v23, %v25
    %v27 = vrot.slane %v16, %v26
    %v28 = vcombine.high %v27, %v27
    %v30 = vunpack.c.l.s4 1966171168
    %v31 = vunpack.c.0.s8 %v30
    %v32 = vlaneseq
    %v33 = vshrl.u32 %v32, 7
    %v34 = vsub.s32 %v31, %v33
    %v35 = vrot.slane %v27, %v34
    %v37 = vunpack.c.l.s4 1966171168
    %v38 = vunpack.c.0.s8 %v37
    %v39 = vlaneseq
    %v40 = vshrl.u32 %v39, 7
    %v41 = vsub.s32 %v38, %v40
    %v42 = vrot.slane %v28, %v41
    %v44 = vunpack.c.l.s4 1966171168
    %v45 = vunpack.c.0.s8 %v44
    %v46 = vlaneseq
    %v47 = vshrl.u32 %v46, 7
    %v48 = vsub.s32 %v45, %v47
    %v49 = vrot.slane %v17, %v48
    %v50 = vcombine.high %v49, %v49
    %v52 = vunpack.c.l.s4 1966171168
    %v53 = vunpack.c.0.s8 %v52
    %v54 = vlaneseq
    %v55 = vshrl.u32 %v54, 7
    %v56 = vsub.s32 %v53, %v55
    %v57 = vrot.slane %v49, %v56
    %v59 = vunpack.c.l.s4 1966171168
    %v60 = vunpack.c.0.s8 %v59
    %v61 = vlaneseq
    %v62 = vshrl.u32 %v61, 7
    %v63 = vsub.s32 %v60, %v62
    %v64 = vrot.slane %v50, %v63
    %v65 = vlaneseq
    %v66 = vshrl.u32 %v65, 7
    %v67 = vsub.s32 0, %v66
    %v68 = vrot.slane %v35, %v67
    %v69 = vlaneseq
    %v70 = vshrl.u32 %v69, 7
    %v71 = vsub.s32 0, %v70
    %v72 = vrot.slane %v42, %v71
    %v73 = vlaneseq
    %v74 = vshrl.u32 %v73, 7
    %v75 = vsub.s32 0, %v74
    %v76 = vrot.slane %v57, %v75
    %v77 = vlaneseq
    %v78 = vshrl.u32 %v77, 7
    %v79 = vsub.s32 0, %v78
    %v80 = vrot.slane %v64, %v79
    %86 = vset.pattern.permute.xlu0 0
    %87 = vperm.xlu0 %86, %v18
    %v88 = vpop.permute.xlu0 %87
    %v90 = vmul.f32 %v68, %v88
    %v91 = vmul.f32 %v72, %v88
    %v92 = vmul.f32 %v76, %v88
    %v93 = vmul.f32 %v80, %v88
    %s94 = scalar_lea.vmem %s1, 48
    %v95 = vld [vmem:[%s94] sm:$0xff]
    %97 = vset.pattern.permute.xlu0 0
    %98 = vperm.xlu0 %97, %v95
    %v99 = vpop.permute.xlu0 %98
    %v101 = vmul.f32 %v68, %v99
    %v102 = vmul.f32 %v72, %v99
    %v103 = vmul.f32 %v76, %v99
    %v104 = vmul.f32 %v80, %v99
    %109 = vrot.lane.b32.xlu0 %v101, 127
    %v110 = vpop.permute.xlu0 %109
    %111 = vrot.lane.b32.xlu0 %v102, 127
    %v112 = vpop.permute.xlu0 %111
    %113 = vrot.lane.b32.xlu0 %v103, 127
    %v114 = vpop.permute.xlu0 %113
    %115 = vrot.lane.b32.xlu0 %v104, 127
    %v116 = vpop.permute.xlu0 %115
    %v121 = vadd.f32 %v90, %v110
    %v122 = vadd.f32 %v91, %v112
    %v123 = vadd.f32 %v92, %v114
    %v124 = vadd.f32 %v93, %v116
    %s125 = scalar_lea.vmem %s1, 96
    %v126 = vld [vmem:[%s125] sm:$0xff]
    %v127 = vcombine.high %v35, %v35
    %v128 = vcombine.high %v57, %v57
    %v129 = vlaneseq
    %v130 = vshrl.u32 %v129, 7
    %v131 = vsub.s32 0, %v130
    %v132 = vrot.slane %v127, %v131
    %v133 = vlaneseq
    %v134 = vshrl.u32 %v133, 7
    %v135 = vsub.s32 0, %v134
    %v136 = vrot.slane %v128, %v135
    %140 = vset.pattern.permute.xlu0 0
    %141 = vperm.xlu0 %140, %v126
    %v142 = vpop.permute.xlu0 %141
    %v144 = vmul.f32 %v72, %v142
    %v145 = vmul.f32 %v132, %v142
    %v146 = vmul.f32 %v80, %v142
    %v147 = vmul.f32 %v136, %v142
    %v148 = vadd.f32 %v121, %v144
    %v149 = vadd.f32 %v122, %v145
    %v150 = vadd.f32 %v123, %v146
    %v151 = vadd.f32 %v124, %v147
    %s152 = scalar_lea.vmem %s1, 144
    %v153 = vld [vmem:[%s152] sm:$0xff]
    %155 = vset.pattern.permute.xlu0 0
    %156 = vperm.xlu0 %155, %v153
    %v157 = vpop.permute.xlu0 %156
    %v159 = vmul.f32 %v72, %v157
    %v160 = vmul.f32 %v132, %v157
    %v161 = vmul.f32 %v80, %v157
    %v162 = vmul.f32 %v136, %v157
    %167 = vrot.lane.b32.xlu0 %v159, 127
    %v168 = vpop.permute.xlu0 %167
    %169 = vrot.lane.b32.xlu0 %v160, 127
    %v170 = vpop.permute.xlu0 %169
    %171 = vrot.lane.b32.xlu0 %v161, 127
    %v172 = vpop.permute.xlu0 %171
    %173 = vrot.lane.b32.xlu0 %v162, 127
    %v174 = vpop.permute.xlu0 %173
    %v179 = vadd.f32 %v148, %v168
    %v180 = vadd.f32 %v149, %v170
    %v181 = vadd.f32 %v150, %v172
    %v182 = vadd.f32 %v151, %v174
    %s183 = scalar_lea.vmem %s1, 88
    %v184 = vld [vmem:[%s183] sm:$0xff]
    %186 = vset.pattern.permute.xlu0 0
    %187 = vperm.xlu0 %186, %v184
    %v188 = vpop.permute.xlu0 %187
    %v190 = vadd.f32 %v179, %v188
    %v191 = vadd.f32 %v180, %v188
    %v192 = vadd.f32 %v181, %v188
    %v193 = vadd.f32 %v182, %v188
    %v194 = vmax.f32 %v190, 0.0
    %v195 = vmax.f32 %v191, 0.0
    %v196 = vmax.f32 %v192, 0.0
    %v197 = vmax.f32 %v193, 0.0
    %s198 = scalar_lea.vmem %s1, 8
    %v199 = vld [vmem:[%s198] sm:$0xff]
    %v200 = vld [vmem:[%s198 + $0x8] sm:$0xff]
    %v201 = vld [vmem:[%s198 + $0x10] sm:$0xff]
    %v202 = vld [vmem:[%s198 + $0x18] sm:$0xff]
    %204 = vset.pattern.permute.xlu0 0
    %205 = vperm.xlu0 %204, %v199
    %v206 = vpop.permute.xlu0 %205
    %209 = vset.pattern.permute.xlu0 0
    %210 = vperm.xlu0 %209, %v200
    %v211 = vpop.permute.xlu0 %210
    %214 = vset.pattern.permute.xlu0 0
    %215 = vperm.xlu0 %214, %v201
    %v216 = vpop.permute.xlu0 %215
    %219 = vset.pattern.permute.xlu0 0
    %220 = vperm.xlu0 %219, %v202
    %v221 = vpop.permute.xlu0 %220
    %v223 = vmul.f32 %v194, %v206
    %v224 = vmul.f32 %v196, %v206
    %v225 = vmul.f32 %v194, %v211
    %v226 = vmul.f32 %v196, %v211
    %v227 = vmul.f32 %v194, %v216
    %v228 = vmul.f32 %v196, %v216
    %v229 = vmul.f32 %v194, %v221
    %v230 = vmul.f32 %v196, %v221
    %s231 = scalar_lea.vmem %s1, 56
    %v232 = vld [vmem:[%s231] sm:$0xff]
    %v233 = vld [vmem:[%s231 + $0x8] sm:$0xff]
    %v234 = vld [vmem:[%s231 + $0x10] sm:$0xff]
    %v235 = vld [vmem:[%s231 + $0x18] sm:$0xff]
    %237 = vset.pattern.permute.xlu0 0
    %238 = vperm.xlu0 %237, %v232
    %v239 = vpop.permute.xlu0 %238
    %242 = vset.pattern.permute.xlu0 0
    %243 = vperm.xlu0 %242, %v233
    %v244 = vpop.permute.xlu0 %243
    %247 = vset.pattern.permute.xlu0 0
    %248 = vperm.xlu0 %247, %v234
    %v249 = vpop.permute.xlu0 %248
    %252 = vset.pattern.permute.xlu0 0
    %253 = vperm.xlu0 %252, %v235
    %v254 = vpop.permute.xlu0 %253
    %v256 = vmul.f32 %v194, %v239
    %v257 = vmul.f32 %v196, %v239
    %v258 = vmul.f32 %v194, %v244
    %v259 = vmul.f32 %v196, %v244
    %v260 = vmul.f32 %v194, %v249
    %v261 = vmul.f32 %v196, %v249
    %v262 = vmul.f32 %v194, %v254
    %v263 = vmul.f32 %v196, %v254
    %272 = vrot.lane.b32.xlu0 %v256, 127
    %v273 = vpop.permute.xlu0 %272
    %274 = vrot.lane.b32.xlu0 %v257, 127
    %v275 = vpop.permute.xlu0 %274
    %276 = vrot.lane.b32.xlu0 %v258, 127
    %v277 = vpop.permute.xlu0 %276
    %278 = vrot.lane.b32.xlu0 %v259, 127
    %v279 = vpop.permute.xlu0 %278
    %280 = vrot.lane.b32.xlu0 %v260, 127
    %v281 = vpop.permute.xlu0 %280
    %282 = vrot.lane.b32.xlu0 %v261, 127
    %v283 = vpop.permute.xlu0 %282
    %284 = vrot.lane.b32.xlu0 %v262, 127
    %v285 = vpop.permute.xlu0 %284
    %286 = vrot.lane.b32.xlu0 %v263, 127
    %v287 = vpop.permute.xlu0 %286
    %v296 = vadd.f32 %v223, %v273
    %v297 = vadd.f32 %v224, %v275
    %v298 = vadd.f32 %v225, %v277
    %v299 = vadd.f32 %v226, %v279
    %v300 = vadd.f32 %v227, %v281
    %v301 = vadd.f32 %v228, %v283
    %v302 = vadd.f32 %v229, %v285
    %v303 = vadd.f32 %v230, %v287
    %s304 = scalar_lea.vmem %s1, 104
    %v305 = vld [vmem:[%s304] sm:$0xff]
    %v306 = vld [vmem:[%s304 + $0x8] sm:$0xff]
    %v307 = vld [vmem:[%s304 + $0x10] sm:$0xff]
    %v308 = vld [vmem:[%s304 + $0x18] sm:$0xff]
    %310 = vset.pattern.permute.xlu0 0
    %311 = vperm.xlu0 %310, %v305
    %v312 = vpop.permute.xlu0 %311
    %315 = vset.pattern.permute.xlu0 0
    %316 = vperm.xlu0 %315, %v306
    %v317 = vpop.permute.xlu0 %316
    %320 = vset.pattern.permute.xlu0 0
    %321 = vperm.xlu0 %320, %v307
    %v322 = vpop.permute.xlu0 %321
    %325 = vset.pattern.permute.xlu0 0
    %326 = vperm.xlu0 %325, %v308
    %v327 = vpop.permute.xlu0 %326
    %v329 = vmul.f32 %v195, %v312
    %v330 = vmul.f32 %v197, %v312
    %v331 = vmul.f32 %v195, %v317
    %v332 = vmul.f32 %v197, %v317
    %v333 = vmul.f32 %v195, %v322
    %v334 = vmul.f32 %v197, %v322
    %v335 = vmul.f32 %v195, %v327
    %v336 = vmul.f32 %v197, %v327
    %v337 = vadd.f32 %v296, %v329
    %v338 = vadd.f32 %v297, %v330
    %v339 = vadd.f32 %v298, %v331
    %v340 = vadd.f32 %v299, %v332
    %v341 = vadd.f32 %v300, %v333
    %v342 = vadd.f32 %v301, %v334
    %v343 = vadd.f32 %v302, %v335
    %v344 = vadd.f32 %v303, %v336
    %s345 = scalar_lea.vmem %s1, 152
    %v346 = vld [vmem:[%s345] sm:$0xff]
    %v347 = vld [vmem:[%s345 + $0x8] sm:$0xff]
    %v348 = vld [vmem:[%s345 + $0x10] sm:$0xff]
    %v349 = vld [vmem:[%s345 + $0x18] sm:$0xff]
    %351 = vset.pattern.permute.xlu0 0
    %352 = vperm.xlu0 %351, %v346
    %v353 = vpop.permute.xlu0 %352
    %356 = vset.pattern.permute.xlu0 0
    %357 = vperm.xlu0 %356, %v347
    %v358 = vpop.permute.xlu0 %357
    %361 = vset.pattern.permute.xlu0 0
    %362 = vperm.xlu0 %361, %v348
    %v363 = vpop.permute.xlu0 %362
    %366 = vset.pattern.permute.xlu0 0
    %367 = vperm.xlu0 %366, %v349
    %v368 = vpop.permute.xlu0 %367
    %v370 = vmul.f32 %v195, %v353
    %v371 = vmul.f32 %v197, %v353
    %v372 = vmul.f32 %v195, %v358
    %v373 = vmul.f32 %v197, %v358
    %v374 = vmul.f32 %v195, %v363
    %v375 = vmul.f32 %v197, %v363
    %v376 = vmul.f32 %v195, %v368
    %v377 = vmul.f32 %v197, %v368
    %386 = vrot.lane.b32.xlu0 %v370, 127
    %v387 = vpop.permute.xlu0 %386
    %388 = vrot.lane.b32.xlu0 %v371, 127
    %v389 = vpop.permute.xlu0 %388
    %390 = vrot.lane.b32.xlu0 %v372, 127
    %v391 = vpop.permute.xlu0 %390
    %392 = vrot.lane.b32.xlu0 %v373, 127
    %v393 = vpop.permute.xlu0 %392
    %394 = vrot.lane.b32.xlu0 %v374, 127
    %v395 = vpop.permute.xlu0 %394
    %396 = vrot.lane.b32.xlu0 %v375, 127
    %v397 = vpop.permute.xlu0 %396
    %398 = vrot.lane.b32.xlu0 %v376, 127
    %v399 = vpop.permute.xlu0 %398
    %400 = vrot.lane.b32.xlu0 %v377, 127
    %v401 = vpop.permute.xlu0 %400
    %v410 = vadd.f32 %v337, %v387
    %v411 = vadd.f32 %v338, %v389
    %v412 = vadd.f32 %v339, %v391
    %v413 = vadd.f32 %v340, %v393
    %v414 = vadd.f32 %v341, %v395
    %v415 = vadd.f32 %v342, %v397
    %v416 = vadd.f32 %v343, %v399
    %v417 = vadd.f32 %v344, %v401
    %s418 = scalar_lea.vmem %s1, 136
    %v419 = vld [vmem:[%s418] sm:$0xf]
    %vm420 = vcmask 1031168
    %v421 = vsel %vm420, %v410, 0.0
    %v422 = vrot.slane %v421, 4
    %v423 = vadd.f32 %v421, %v422
    %v424 = vrot.slane %v423, 2
    %v425 = vadd.f32 %v423, %v424
    %v426 = vrot.slane %v425, 1
    %v427 = vadd.f32 %v425, %v426
    %v428 = vsel %vm420, %v411, 0.0
    %v429 = vrot.slane %v428, 4
    %v430 = vadd.f32 %v428, %v429
    %v431 = vrot.slane %v430, 2
    %v432 = vadd.f32 %v430, %v431
    %v433 = vrot.slane %v432, 1
    %v434 = vadd.f32 %v432, %v433
    %v435 = vsel %vm420, %v412, 0.0
    %v436 = vrot.slane %v435, 4
    %v437 = vadd.f32 %v435, %v436
    %v438 = vrot.slane %v437, 2
    %v439 = vadd.f32 %v437, %v438
    %v440 = vrot.slane %v439, 1
    %v441 = vadd.f32 %v439, %v440
    %v442 = vsel %vm420, %v413, 0.0
    %v443 = vrot.slane %v442, 4
    %v444 = vadd.f32 %v442, %v443
    %v445 = vrot.slane %v444, 2
    %v446 = vadd.f32 %v444, %v445
    %v447 = vrot.slane %v446, 1
    %v448 = vadd.f32 %v446, %v447
    %v449 = vsel %vm420, %v414, 0.0
    %v450 = vrot.slane %v449, 4
    %v451 = vadd.f32 %v449, %v450
    %v452 = vrot.slane %v451, 2
    %v453 = vadd.f32 %v451, %v452
    %v454 = vrot.slane %v453, 1
    %v455 = vadd.f32 %v453, %v454
    %v456 = vsel %vm420, %v415, 0.0
    %v457 = vrot.slane %v456, 4
    %v458 = vadd.f32 %v456, %v457
    %v459 = vrot.slane %v458, 2
    %v460 = vadd.f32 %v458, %v459
    %v461 = vrot.slane %v460, 1
    %v462 = vadd.f32 %v460, %v461
    %v463 = vsel %vm420, %v416, 0.0
    %v464 = vrot.slane %v463, 4
    %v465 = vadd.f32 %v463, %v464
    %v466 = vrot.slane %v465, 2
    %v467 = vadd.f32 %v465, %v466
    %v468 = vrot.slane %v467, 1
    %v469 = vadd.f32 %v467, %v468
    %v470 = vsel %vm420, %v417, 0.0
    %v471 = vrot.slane %v470, 4
    %v472 = vadd.f32 %v470, %v471
    %v473 = vrot.slane %v472, 2
    %v474 = vadd.f32 %v472, %v473
    %v475 = vrot.slane %v474, 1
    %v476 = vadd.f32 %v474, %v475
    %v479 = vunpack.c.l.s4 1966171168
    %v480 = vunpack.c.0.s8 %v479
    %v481 = vlaneseq
    %v482 = vshrl.u32 %v481, 7
    %v483 = vsub.s32 %v480, %v482
    %v484 = vrot.slane %v419, %v483
    %v485 = vcombine.high %v484, %v484
    %v487 = vunpack.c.l.s4 1966171168
    %v488 = vunpack.c.0.s8 %v487
    %v489 = vlaneseq
    %v490 = vshrl.u32 %v489, 7
    %v491 = vsub.s32 %v488, %v490
    %v492 = vrot.slane %v484, %v491
    %v494 = vunpack.c.l.s4 1966171168
    %v495 = vunpack.c.0.s8 %v494
    %v496 = vlaneseq
    %v497 = vshrl.u32 %v496, 7
    %v498 = vsub.s32 %v495, %v497
    %v499 = vrot.slane %v485, %v498
    %v500 = vcombine.high %v492, %v492
    %v501 = vcombine.high %v499, %v499
    %v502 = vlaneseq
    %v503 = vshrl.u32 %v502, 7
    %v504 = vsub.s32 0, %v503
    %v505 = vrot.slane %v492, %v504
    %v506 = vlaneseq
    %v507 = vshrl.u32 %v506, 7
    %v508 = vsub.s32 0, %v507
    %v509 = vrot.slane %v499, %v508
    %v510 = vlaneseq
    %v511 = vshrl.u32 %v510, 7
    %v512 = vsub.s32 0, %v511
    %v513 = vrot.slane %v500, %v512
    %v514 = vlaneseq
    %v515 = vshrl.u32 %v514, 7
    %v516 = vsub.s32 0, %v515
    %v517 = vrot.slane %v501, %v516
    %518 = vset.pattern.permute.xlu0 0
    %519 = vperm.xlu0 %518, %v505
    %v520 = vpop.permute.xlu0 %519
    %522 = vset.pattern.permute.xlu0 0
    %523 = vperm.xlu0 %522, %v509
    %v524 = vpop.permute.xlu0 %523
    %526 = vset.pattern.permute.xlu0 0
    %527 = vperm.xlu0 %526, %v513
    %v528 = vpop.permute.xlu0 %527
    %530 = vset.pattern.permute.xlu0 0
    %531 = vperm.xlu0 %530, %v517
    %v532 = vpop.permute.xlu0 %531
    %v534 = vadd.f32 %v427, %v520
    %v535 = vadd.f32 %v434, %v520
    %v536 = vadd.f32 %v441, %v524
    %v537 = vadd.f32 %v448, %v524
    %v538 = vadd.f32 %v455, %v528
    %v539 = vadd.f32 %v462, %v528
    %v540 = vadd.f32 %v469, %v532
    %v541 = vadd.f32 %v476, %v532
    %v542 = vmax.f32 %v534, 0.0
    %v543 = vmax.f32 %v535, 0.0
    %v544 = vmax.f32 %v536, 0.0
    %v545 = vmax.f32 %v537, 0.0
    %v546 = vmax.f32 %v538, 0.0
    %v547 = vmax.f32 %v539, 0.0
    %v548 = vmax.f32 %v540, 0.0
    %v549 = vmax.f32 %v541, 0.0
    %v550 = vpack.c.bf16 %v542, %v542
    %v551 = vpack.c.bf16 %v543, %v543
    %v552 = vpack.c.bf16 %v544, %v544
    %v553 = vpack.c.bf16 %v545, %v545
    %v554 = vpack.c.bf16 %v546, %v546
    %v555 = vpack.c.bf16 %v547, %v547
    %v556 = vpack.c.bf16 %v548, %v548
    %v557 = vpack.c.bf16 %v549, %v549
    %v558 = vld [vmem:[%s2] sm:$0xf]
    %v559 = vld [vmem:[%s2 + $0x4] sm:$0xf]
    %v560 = vld [vmem:[%s2 + $0x8] sm:$0xf]
    %v561 = vld [vmem:[%s2 + $0xc] sm:$0xf]
    %v562 = vld [vmem:[%s2 + $0x10] sm:$0xf]
    %v563 = vld [vmem:[%s2 + $0x14] sm:$0xf]
    %v564 = vld [vmem:[%s2 + $0x18] sm:$0xf]
    %v565 = vld [vmem:[%s2 + $0x1c] sm:$0xf]
    %v566 = vld [vmem:[%s2 + $0x20] sm:$0xf]
    %v567 = vld [vmem:[%s2 + $0x24] sm:$0xf]
    %v568 = vld [vmem:[%s2 + $0x28] sm:$0xf]
    %v569 = vld [vmem:[%s2 + $0x2c] sm:$0xf]
    %v570 = vld [vmem:[%s2 + $0x30] sm:$0xf]
    %v571 = vld [vmem:[%s2 + $0x34] sm:$0xf]
    %v572 = vld [vmem:[%s2 + $0x38] sm:$0xf]
    %v573 = vld [vmem:[%s2 + $0x3c] sm:$0x7]
    %s574 = scalar_lea.vmem %s2, 64
    %v575 = vld [vmem:[%s574] sm:$0xf]
    %v576 = vld [vmem:[%s574 + $0x4] sm:$0xf]
    %v577 = vld [vmem:[%s574 + $0x8] sm:$0xf]
    %v578 = vld [vmem:[%s574 + $0xc] sm:$0xf]
    %v579 = vld [vmem:[%s574 + $0x10] sm:$0xf]
    %v580 = vld [vmem:[%s574 + $0x14] sm:$0xf]
    %v581 = vld [vmem:[%s574 + $0x18] sm:$0xf]
    %v582 = vld [vmem:[%s574 + $0x1c] sm:$0xf]
    %v583 = vld [vmem:[%s574 + $0x20] sm:$0xf]
    %v584 = vld [vmem:[%s574 + $0x24] sm:$0xf]
    %v585 = vld [vmem:[%s574 + $0x28] sm:$0xf]
    %v586 = vld [vmem:[%s574 + $0x2c] sm:$0xf]
    %v587 = vld [vmem:[%s574 + $0x30] sm:$0xf]
    %v588 = vld [vmem:[%s574 + $0x34] sm:$0xf]
    %v589 = vld [vmem:[%s574 + $0x38] sm:$0xf]
    %v590 = vld [vmem:[%s574 + $0x3c] sm:$0x7]
    %v593 = vunpack.c.l.b16 %v552
    %v594 = vunpack.c.l.b16 %v553
    %vm595 = vcmask 1041409
    %v596 = vsel %vm595, %v594, %v593
    %v597 = vpack.c.b16 %v596, %v596
    %v614 = vunpack.c.l.b16 %v575
    %v615 = vunpack.c.l.b16 %v576
    %v616 = vunpack.c.l.b16 %v577
    %v617 = vunpack.c.l.b16 %v578
    %v618 = vunpack.c.l.b16 %v579
    %v619 = vunpack.c.l.b16 %v580
    %v620 = vunpack.c.l.b16 %v581
    %v621 = vunpack.c.l.b16 %v582
    %v622 = vunpack.c.l.b16 %v583
    %v623 = vunpack.c.l.b16 %v584
    %v624 = vunpack.c.l.b16 %v585
    %v625 = vunpack.c.l.b16 %v586
    %v626 = vunpack.c.l.b16 %v587
    %v627 = vunpack.c.l.b16 %v588
    %v628 = vunpack.c.l.b16 %v589
    %v629 = vunpack.c.l.b16 %v590
    %v630 = vpack.c.b16 %v615, %v614
    %v631 = vpack.c.b16 %v617, %v616
    %v632 = vpack.c.b16 %v619, %v618
    %v633 = vpack.c.b16 %v621, %v620
    %v634 = vpack.c.b16 %v623, %v622
    %v635 = vpack.c.b16 %v625, %v624
    %v636 = vpack.c.b16 %v627, %v626
    %v637 = vpack.c.b16 %v629, %v628
    %v646 = vsel %vm420, %v597, 0
    %vm648 = vcmask 1046528
    %v650 = vsel %vm648, %v637, 0
    %652 = vmatprep.subr.bf16.mxu0 0
    %653 = vmatpush1.bf16.msra.mxu0 %v650
    %654 = vmatprep.subr.bf16.mxu0 0
    %655 = vmatpush1.bf16.msra.mxu0 %v636
    %656 = vmatprep.subr.bf16.mxu0 0
    %657 = vmatpush1.bf16.msra.mxu0 %v635
    %658 = vmatprep.subr.bf16.mxu0 0
    %659 = vmatpush1.bf16.msra.mxu0 %v634
    %660 = vmatprep.subr.bf16.mxu0 0
    %661 = vmatpush1.bf16.msra.mxu0 %v633
    %662 = vmatprep.subr.bf16.mxu0 0
    %663 = vmatpush1.bf16.msra.mxu0 %v632
    %664 = vmatprep.subr.bf16.mxu0 0
    %665 = vmatpush1.bf16.msra.mxu0 %v631
    %666 = vmatprep.subr.bf16.mxu0 0
    %667 = vmatpush1.bf16.msra.mxu0 %v630
    %668 = vmatprep.subr.bf16.mxu0 0
    %669 = vmatpush2.bf16.msra.mxu0 0
    %670 = vmatprep.subr.bf16.mxu0 0
    %671 = vmatpush2.bf16.msra.mxu0 0
    %672 = vmatprep.subr.bf16.mxu0 0
    %673 = vmatpush2.bf16.msra.mxu0 0
    %674 = vmatprep.subr.bf16.mxu0 0
    %675 = vmatpush2.bf16.msra.mxu0 0
    %676 = vmatprep.subr.bf16.mxu0 0
    %677 = vmatpush2.bf16.msra.mxu0 0
    %678 = vmatprep.subr.bf16.mxu0 0
    %679 = vmatpush2.bf16.msra.mxu0 0
    %680 = vmatprep.subr.bf16.mxu0 0
    %681 = vmatpush2.bf16.msra.mxu0 0
    %682 = vmatprep.subr.bf16.mxu0 0
    %683 = vmatpush2.bf16.msra.mxu0 0
    %684 = vmatprep.mubr.bf16.mxu0 0
    %685 = vmatmul.mubr.bf16.gmra.mxu0 %v646
    %v686 = vpop.f32.mrf.mxu0
    %v687 = vadd.f32 0.0, %v686
    %v688 = vpop.f32.mrf.mxu0
    %v689 = vpop.f32.mrf.mxu0
    %v690 = vpop.f32.mrf.mxu0
    %691 = vdwg.mxu0
    %s692 = scalar_lea.vmem %s2, 128
    %v693 = vld [vmem:[%s692] sm:$0xf]
    %v694 = vld [vmem:[%s692 + $0x4] sm:$0xf]
    %v695 = vld [vmem:[%s692 + $0x8] sm:$0xf]
    %v696 = vld [vmem:[%s692 + $0xc] sm:$0xf]
    %v697 = vld [vmem:[%s692 + $0x10] sm:$0xf]
    %v698 = vld [vmem:[%s692 + $0x14] sm:$0xf]
    %v699 = vld [vmem:[%s692 + $0x18] sm:$0xf]
    %v700 = vld [vmem:[%s692 + $0x1c] sm:$0xf]
    %v701 = vld [vmem:[%s692 + $0x20] sm:$0xf]
    %v702 = vld [vmem:[%s692 + $0x24] sm:$0xf]
    %v703 = vld [vmem:[%s692 + $0x28] sm:$0xf]
    %v704 = vld [vmem:[%s692 + $0x2c] sm:$0xf]
    %v705 = vld [vmem:[%s692 + $0x30] sm:$0xf]
    %v706 = vld [vmem:[%s692 + $0x34] sm:$0xf]
    %v707 = vld [vmem:[%s692 + $0x38] sm:$0xf]
    %v708 = vld [vmem:[%s692 + $0x3c] sm:$0x7]
    %s709 = scalar_lea.vmem %s2, 192
    %v710 = vld [vmem:[%s709] sm:$0xf]
    %v711 = vld [vmem:[%s709 + $0x4] sm:$0xf]
    %v712 = vld [vmem:[%s709 + $0x8] sm:$0xf]
    %v713 = vld [vmem:[%s709 + $0xc] sm:$0xf]
    %v714 = vld [vmem:[%s709 + $0x10] sm:$0xf]
    %v715 = vld [vmem:[%s709 + $0x14] sm:$0xf]
    %v716 = vld [vmem:[%s709 + $0x18] sm:$0xf]
    %v717 = vld [vmem:[%s709 + $0x1c] sm:$0xf]
    %v718 = vld [vmem:[%s709 + $0x20] sm:$0xf]
    %v719 = vld [vmem:[%s709 + $0x24] sm:$0xf]
    %v720 = vld [vmem:[%s709 + $0x28] sm:$0xf]
    %v721 = vld [vmem:[%s709 + $0x2c] sm:$0xf]
    %v722 = vld [vmem:[%s709 + $0x30] sm:$0xf]
    %v723 = vld [vmem:[%s709 + $0x34] sm:$0xf]
    %v724 = vld [vmem:[%s709 + $0x38] sm:$0xf]
    %v725 = vld [vmem:[%s709 + $0x3c] sm:$0x7]
    %v728 = vunpack.c.l.b16 %v556
    %v729 = vunpack.c.l.b16 %v557
    %v730 = vsel %vm595, %v729, %v728
    %v731 = vpack.c.b16 %v730, %v730
    %v748 = vunpack.c.l.b16 %v710
    %v749 = vunpack.c.l.b16 %v711
    %v750 = vunpack.c.l.b16 %v712
    %v751 = vunpack.c.l.b16 %v713
    %v752 = vunpack.c.l.b16 %v714
    %v753 = vunpack.c.l.b16 %v715
    %v754 = vunpack.c.l.b16 %v716
    %v755 = vunpack.c.l.b16 %v717
    %v756 = vunpack.c.l.b16 %v718
    %v757 = vunpack.c.l.b16 %v719
    %v758 = vunpack.c.l.b16 %v720
    %v759 = vunpack.c.l.b16 %v721
    %v760 = vunpack.c.l.b16 %v722
    %v761 = vunpack.c.l.b16 %v723
    %v762 = vunpack.c.l.b16 %v724
    %v763 = vunpack.c.l.b16 %v725
    %v764 = vpack.c.b16 %v749, %v748
    %v765 = vpack.c.b16 %v751, %v750
    %v766 = vpack.c.b16 %v753, %v752
    %v767 = vpack.c.b16 %v755, %v754
    %v768 = vpack.c.b16 %v757, %v756
    %v769 = vpack.c.b16 %v759, %v758
    %v770 = vpack.c.b16 %v761, %v760
    %v771 = vpack.c.b16 %v763, %v762
    %v780 = vsel %vm420, %v731, 0
    %v783 = vsel %vm648, %v771, 0
    %785 = vmatprep.subr.bf16.mxu0 0
    %786 = vmatpush1.bf16.msra.mxu0 %v783
    %787 = vmatprep.subr.bf16.mxu0 0
    %788 = vmatpush1.bf16.msra.mxu0 %v770
    %789 = vmatprep.subr.bf16.mxu0 0
    %790 = vmatpush1.bf16.msra.mxu0 %v769
    %791 = vmatprep.subr.bf16.mxu0 0
    %792 = vmatpush1.bf16.msra.mxu0 %v768
    %793 = vmatprep.subr.bf16.mxu0 0
    %794 = vmatpush1.bf16.msra.mxu0 %v767
    %795 = vmatprep.subr.bf16.mxu0 0
    %796 = vmatpush1.bf16.msra.mxu0 %v766
    %797 = vmatprep.subr.bf16.mxu0 0
    %798 = vmatpush1.bf16.msra.mxu0 %v765
    %799 = vmatprep.subr.bf16.mxu0 0
    %800 = vmatpush1.bf16.msra.mxu0 %v764
    %801 = vmatprep.subr.bf16.mxu0 0
    %802 = vmatpush2.bf16.msra.mxu0 0
    %803 = vmatprep.subr.bf16.mxu0 0
    %804 = vmatpush2.bf16.msra.mxu0 0
    %805 = vmatprep.subr.bf16.mxu0 0
    %806 = vmatpush2.bf16.msra.mxu0 0
    %807 = vmatprep.subr.bf16.mxu0 0
    %808 = vmatpush2.bf16.msra.mxu0 0
    %809 = vmatprep.subr.bf16.mxu0 0
    %810 = vmatpush2.bf16.msra.mxu0 0
    %811 = vmatprep.subr.bf16.mxu0 0
    %812 = vmatpush2.bf16.msra.mxu0 0
    %813 = vmatprep.subr.bf16.mxu0 0
    %814 = vmatpush2.bf16.msra.mxu0 0
    %815 = vmatprep.subr.bf16.mxu0 0
    %816 = vmatpush2.bf16.msra.mxu0 0
    %817 = vmatprep.mubr.bf16.mxu0 0
    %818 = vmatmul.mubr.bf16.gmra.mxu0 %v780
    %v819 = vpop.f32.mrf.mxu0
    %v820 = vadd.f32 0.0, %v819
    %v821 = vpop.f32.mrf.mxu0
    %v822 = vpop.f32.mrf.mxu0
    %v823 = vpop.f32.mrf.mxu0
    %824 = vdwg.mxu0
    %v827 = vunpack.c.l.b16 %v550
    %v828 = vunpack.c.l.b16 %v551
    %v829 = vsel %vm595, %v828, %v827
    %v830 = vpack.c.b16 %v829, %v829
    %v847 = vunpack.c.l.b16 %v558
    %v848 = vunpack.c.l.b16 %v559
    %v849 = vunpack.c.l.b16 %v560
    %v850 = vunpack.c.l.b16 %v561
    %v851 = vunpack.c.l.b16 %v562
    %v852 = vunpack.c.l.b16 %v563
    %v853 = vunpack.c.l.b16 %v564
    %v854 = vunpack.c.l.b16 %v565
    %v855 = vunpack.c.l.b16 %v566
    %v856 = vunpack.c.l.b16 %v567
    %v857 = vunpack.c.l.b16 %v568
    %v858 = vunpack.c.l.b16 %v569
    %v859 = vunpack.c.l.b16 %v570
    %v860 = vunpack.c.l.b16 %v571
    %v861 = vunpack.c.l.b16 %v572
    %v862 = vunpack.c.l.b16 %v573
    %v863 = vpack.c.b16 %v848, %v847
    %v864 = vpack.c.b16 %v850, %v849
    %v865 = vpack.c.b16 %v852, %v851
    %v866 = vpack.c.b16 %v854, %v853
    %v867 = vpack.c.b16 %v856, %v855
    %v868 = vpack.c.b16 %v858, %v857
    %v869 = vpack.c.b16 %v860, %v859
    %v870 = vpack.c.b16 %v862, %v861
    %v879 = vsel %vm420, %v830, 0
    %v882 = vsel %vm648, %v870, 0
    %884 = vmatprep.subr.bf16.mxu0 0
    %885 = vmatpush1.bf16.msra.mxu0 %v882
    %886 = vmatprep.subr.bf16.mxu0 0
    %887 = vmatpush1.bf16.msra.mxu0 %v869
    %888 = vmatprep.subr.bf16.mxu0 0
    %889 = vmatpush1.bf16.msra.mxu0 %v868
    %890 = vmatprep.subr.bf16.mxu0 0
    %891 = vmatpush1.bf16.msra.mxu0 %v867
    %892 = vmatprep.subr.bf16.mxu0 0
    %893 = vmatpush1.bf16.msra.mxu0 %v866
    %894 = vmatprep.subr.bf16.mxu0 0
    %895 = vmatpush1.bf16.msra.mxu0 %v865
    %896 = vmatprep.subr.bf16.mxu0 0
    %897 = vmatpush1.bf16.msra.mxu0 %v864
    %898 = vmatprep.subr.bf16.mxu0 0
    %899 = vmatpush1.bf16.msra.mxu0 %v863
    %900 = vmatprep.subr.bf16.mxu0 0
    %901 = vmatpush2.bf16.msra.mxu0 0
    %902 = vmatprep.subr.bf16.mxu0 0
    %903 = vmatpush2.bf16.msra.mxu0 0
    %904 = vmatprep.subr.bf16.mxu0 0
    %905 = vmatpush2.bf16.msra.mxu0 0
    %906 = vmatprep.subr.bf16.mxu0 0
    %907 = vmatpush2.bf16.msra.mxu0 0
    %908 = vmatprep.subr.bf16.mxu0 0
    %909 = vmatpush2.bf16.msra.mxu0 0
    %910 = vmatprep.subr.bf16.mxu0 0
    %911 = vmatpush2.bf16.msra.mxu0 0
    %912 = vmatprep.subr.bf16.mxu0 0
    %913 = vmatpush2.bf16.msra.mxu0 0
    %914 = vmatprep.subr.bf16.mxu0 0
    %915 = vmatpush2.bf16.msra.mxu0 0
    %916 = vmatprep.mubr.bf16.mxu0 0
    %917 = vmatmul.mubr.bf16.gmra.mxu0 %v879
    %v918 = vpop.f32.mrf.mxu0
    %v919 = vadd.f32 %v687, %v918
    %v920 = vpop.f32.mrf.mxu0
    %v921 = vpop.f32.mrf.mxu0
    %v922 = vpop.f32.mrf.mxu0
    %923 = vdwg.mxu0
    %v926 = vunpack.c.l.b16 %v554
    %v927 = vunpack.c.l.b16 %v555
    %v928 = vsel %vm595, %v927, %v926
    %v929 = vpack.c.b16 %v928, %v928
    %v946 = vunpack.c.l.b16 %v693
    %v947 = vunpack.c.l.b16 %v694
    %v948 = vunpack.c.l.b16 %v695
    %v949 = vunpack.c.l.b16 %v696
    %v950 = vunpack.c.l.b16 %v697
    %v951 = vunpack.c.l.b16 %v698
    %v952 = vunpack.c.l.b16 %v699
    %v953 = vunpack.c.l.b16 %v700
    %v954 = vunpack.c.l.b16 %v701
    %v955 = vunpack.c.l.b16 %v702
    %v956 = vunpack.c.l.b16 %v703
    %v957 = vunpack.c.l.b16 %v704
    %v958 = vunpack.c.l.b16 %v705
    %v959 = vunpack.c.l.b16 %v706
    %v960 = vunpack.c.l.b16 %v707
    %v961 = vunpack.c.l.b16 %v708
    %v962 = vpack.c.b16 %v947, %v946
    %v963 = vpack.c.b16 %v949, %v948
    %v964 = vpack.c.b16 %v951, %v950
    %v965 = vpack.c.b16 %v953, %v952
    %v966 = vpack.c.b16 %v955, %v954
    %v967 = vpack.c.b16 %v957, %v956
    %v968 = vpack.c.b16 %v959, %v958
    %v969 = vpack.c.b16 %v961, %v960
    %v978 = vsel %vm420, %v929, 0
    %v981 = vsel %vm648, %v969, 0
    %983 = vmatprep.subr.bf16.mxu0 0
    %984 = vmatpush1.bf16.msra.mxu0 %v981
    %985 = vmatprep.subr.bf16.mxu0 0
    %986 = vmatpush1.bf16.msra.mxu0 %v968
    %987 = vmatprep.subr.bf16.mxu0 0
    %988 = vmatpush1.bf16.msra.mxu0 %v967
    %989 = vmatprep.subr.bf16.mxu0 0
    %990 = vmatpush1.bf16.msra.mxu0 %v966
    %991 = vmatprep.subr.bf16.mxu0 0
    %992 = vmatpush1.bf16.msra.mxu0 %v965
    %993 = vmatprep.subr.bf16.mxu0 0
    %994 = vmatpush1.bf16.msra.mxu0 %v964
    %995 = vmatprep.subr.bf16.mxu0 0
    %996 = vmatpush1.bf16.msra.mxu0 %v963
    %997 = vmatprep.subr.bf16.mxu0 0
    %998 = vmatpush1.bf16.msra.mxu0 %v962
    %999 = vmatprep.subr.bf16.mxu0 0
    %1000 = vmatpush2.bf16.msra.mxu0 0
    %1001 = vmatprep.subr.bf16.mxu0 0
    %1002 = vmatpush2.bf16.msra.mxu0 0
    %1003 = vmatprep.subr.bf16.mxu0 0
    %1004 = vmatpush2.bf16.msra.mxu0 0
    %1005 = vmatprep.subr.bf16.mxu0 0
    %1006 = vmatpush2.bf16.msra.mxu0 0
    %1007 = vmatprep.subr.bf16.mxu0 0
    %1008 = vmatpush2.bf16.msra.mxu0 0
    %1009 = vmatprep.subr.bf16.mxu0 0
    %1010 = vmatpush2.bf16.msra.mxu0 0
    %1011 = vmatprep.subr.bf16.mxu0 0
    %1012 = vmatpush2.bf16.msra.mxu0 0
    %1013 = vmatprep.subr.bf16.mxu0 0
    %1014 = vmatpush2.bf16.msra.mxu0 0
    %1015 = vmatprep.mubr.bf16.mxu0 0
    %1016 = vmatmul.mubr.bf16.gmra.mxu0 %v978
    %v1017 = vpop.f32.mrf.mxu0
    %v1018 = vadd.f32 %v820, %v1017
    %v1019 = vpop.f32.mrf.mxu0
    %v1020 = vpop.f32.mrf.mxu0
    %v1021 = vpop.f32.mrf.mxu0
    %1022 = vdwg.mxu0
    %v1023 = vadd.f32 %v919, %v1018
    %s1024 = scalar_lea.vmem %s1, 40
    %v1025 = vld [vmem:[%s1024] sm:$0x1]
    %v1026 = vlaneseq
    %v1027 = vshrl.u32 %v1026, 7
    %v1028 = vsub.s32 0, %v1027
    %v1029 = vrot.slane %v1025, %v1028
    %v1030 = vadd.f32 %v1023, %v1029
    %v1031 = vmul.f32 %v1030, 0.5
    %v1032 = vtanh.pop %v1031
    %v1033 = vmul.f32 %v1032, 0.5
    %v1034 = vadd.f32 %v1033, 0.5
    %1035 = vst [vmem:[#allocation2] sm:$0x3] %v1034
    // Predicated region
    $region14: #{_cnn_forward_jit.1} parent=1 // pred_check
      _
    $region15: #{_cnn_forward_jit.1} parent=1 // pred_check_branch
      %1037 = sbr.rel (0) target = $region17
    $region16: #{_cnn_forward_jit.1} parent=1 // pred_region
      %s1039 = ssub.s32 32, 32
      %1040 = vsyncadd [#allocation3], %s1039
      %s1042 = sshll.u32 [#allocation2], 4
      %s1043 = int_to_ptr.vmem [resolvable:$true] %s1042
      %1045 = dma.vmem_to_hbm [thread:$0]  %s1043, 32, %s3, [#allocation3]
    $region17: #{_cnn_forward_jit.1} parent=1 // pred_fallthru
      _
    // Predicated region
    $region18: #{_cnn_forward_jit.1} parent=1 // pred_check
      _
    $region19: #{_cnn_forward_jit.1} parent=1 // pred_check_branch
      %1047 = sbr.rel (0) target = $region21
    $region20: #{_cnn_forward_jit.1} parent=1 // pred_region
      %1048 = dma.done [#allocation3], 32
    $region21: #{_cnn_forward_jit.1} parent=1 // pred_fallthru
      _
    %1049 = vsyncpa [#allocation3], 1

</llo_original>
